<compile_context>
chip_gen: v6e
topology: v6e:2x2x1
jax: 0.10.0
libtpu: 0.0.40
codegen_flags: <defaults>
</compile_context>

<pallas_src>
import jax
import jax.numpy as jnp
from jax import lax
from jax.experimental import pallas as pl
from jax.experimental.pallas import tpu as pltpu


def feature_extractor_kernel(x_ref, w1_ref, b1_ref, w2a_ref, b2a_ref,
                             gamma_ref, beta_ref, seg_ref, o_ref):
    Ef = seg_ref.shape[0]

    # ---- MLP layer 1: explicit bf16 operands -> exactly 1 MXU pass per
    # 128x128 weight tile, f32 accumulation.
    x = x_ref[...].astype(jnp.bfloat16)              # no-op if x already bf16
    h = jnp.dot(x, w1_ref[...], preferred_element_type=jnp.float32)
    h = jnp.maximum(h + b1_ref[...], 0.0)            # bias + ReLU (f32 VPU)

    # ---- MLP layer 2 fused with the segmented-mean reduction:
    # RHS = [W2 | W2@seg], so y and its per-segment mean come from one dot.
    y2 = jnp.dot(h.astype(jnp.bfloat16), w2a_ref[...],
                 preferred_element_type=jnp.float32) + b2a_ref[...]
    y = y2[:, :Ef]
    mean = y2[:, Ef:]

    # ---- Segmented LayerNorm over each emb_size-wide lane segment ----
    centered = y - mean
    sq = centered * centered
    # hi/lo bf16 split keeps the variance ~f32 accurate while using explicit
    # single-pass bf16 dots (seg entries 1/emb_size are bf16-exact for pow2 E).
    sq_hi = sq.astype(jnp.bfloat16)
    sq_lo = (sq - sq_hi.astype(jnp.float32)).astype(jnp.bfloat16)
    var = (jnp.dot(sq_hi, seg_ref[...], preferred_element_type=jnp.float32) +
           jnp.dot(sq_lo, seg_ref[...], preferred_element_type=jnp.float32))
    y_norm = centered * lax.rsqrt(var + 1e-5)        # nn.LayerNorm eps
    o_ref[...] = (y_norm * gamma_ref[...] + beta_ref[...]).astype(o_ref.dtype)


def make_feature_extractor(w1, b1, w2, b2, gamma, beta, *, seq_length,
                           emb_size, out_dtype=jnp.bfloat16, tm_cap=2048):
    """Returns a jitted fn: x (batch, seq, num_words) -> (batch, seq*emb_size)."""
    num_words, hidden_size = w1.shape
    assert w2.shape == (hidden_size, emb_size)

    # Lane-packing factor: fold G logical rows into one physical row so every
    # slab in the kernel is 128-lane dense and all stores are unmasked.
    if emb_size < 128 and 128 % emb_size == 0:
        G = 128 // emb_size
    else:
        G = 1  # TODO(synk): emb_size not dividing 128 keeps masked partial stores.
    Kf, Hf, Ef = G * num_words, G * hidden_size, G * emb_size

    # ---- One-time parameter folding (hoisted out of the per-call path). ----
    eye_g = jnp.eye(G, dtype=jnp.float32)
    w1f = jnp.kron(eye_g, w1.astype(jnp.float32)).astype(jnp.bfloat16)
    w2f = jnp.kron(eye_g, w2.astype(jnp.float32))
    segf = jnp.kron(eye_g, jnp.full((emb_size, emb_size), 1.0 / emb_size,
                                    jnp.float32))
    w2a = jnp.concatenate([w2f, w2f @ segf], axis=1).astype(jnp.bfloat16)
    b1f = jnp.tile(b1.astype(jnp.float32), G).reshape(1, Hf)
    b2f = jnp.tile(b2.astype(jnp.float32), G).reshape(1, Ef)
    b2a = jnp.concatenate([b2f, b2f @ segf], axis=1)           # (1, 2*Ef) f32
    gammaf = jnp.tile(gamma.astype(jnp.float32), G).reshape(1, Ef)
    betaf = jnp.tile(beta.astype(jnp.float32), G).reshape(1, Ef)
    segf_bf = segf.astype(jnp.bfloat16)
    params = (w1f, b1f, w2a, b2a, gammaf, betaf, segf_bf)

    @jax.jit
    def apply(x):
        batch, seq, nw = x.shape
        assert seq == seq_length and nw == num_words
        rows = batch * seq

        # Pad rows only up to a multiple of G (a no-op whenever rows % G == 0);
        # no pad-to-tile-size and no output slice in the common case.
        rf = pl.cdiv(rows, G)
        rows_p = rf * G
        x2d = x.reshape(rows, num_words)
        if rows_p != rows:
            x2d = jnp.pad(x2d, ((0, rows_p - rows), (0, 0)))
        xf = x2d.reshape(rf, Kf)                    # free row-major fold

        # Row-tile size: large tiles for HBM-roofline efficiency, capped for
        # v7x's 64 MiB VMEM, with >= 2 grid steps whenever possible so both
        # v7x TensorCores get work under megacore sharding.
        if rf <= 8:
            tm = rf                                 # block == full array dim
        else:
            n_tiles = max(2, pl.cdiv(rf, tm_cap))
            tm = pl.cdiv(pl.cdiv(rf, n_tiles), 8) * 8
        grid = (pl.cdiv(rf, tm),)

        const = lambda i: (0, 0)                    # weights stay VMEM-resident
        in_bytes = jnp.dtype(x.dtype).itemsize
        out_bytes = jnp.dtype(out_dtype).itemsize
        cost = pl.CostEstimate(
            flops=2 * rf * (Kf * Hf + Hf * 2 * Ef + 2 * Ef * Ef),
            transcendentals=rf * Ef,
            bytes_accessed=(rf * Kf * in_bytes + rf * Ef * out_bytes
                            + 2 * (w1f.size + w2a.size + segf_bf.size)
                            + 4 * (b1f.size + b2a.size + gammaf.size
                                   + betaf.size)))

        w1_, b1_, w2a_, b2a_, gamma_, beta_, seg_ = params
        out_f = pl.pallas_call(
            feature_extractor_kernel,
            out_shape=jax.ShapeDtypeStruct((rf, Ef), out_dtype),
            grid=grid,
            in_specs=[
                pl.BlockSpec((tm, Kf), lambda i: (i, 0)),   # x tile (lane dense)
                pl.BlockSpec((Kf, Hf), const),              # W1 (block-diag, bf16)
                pl.BlockSpec((1, Hf), const),               # b1
                pl.BlockSpec((Hf, 2 * Ef), const),          # [W2 | W2@seg] (bf16)
                pl.BlockSpec((1, 2 * Ef), const),           # [b2 | b2@seg]
                pl.BlockSpec((1, Ef), const),               # gamma
                pl.BlockSpec((1, Ef), const),               # beta
                pl.BlockSpec((Ef, Ef), const),              # segment-mean matrix
            ],
            out_specs=pl.BlockSpec((tm, Ef), lambda i: (i, 0)),
            compiler_params=pltpu.CompilerParams(
                dimension_semantics=("parallel",),
                vmem_limit_bytes=32 * 1024 * 1024),
            cost_estimate=cost,
        )(xf, w1_, b1_, w2a_, b2a_, gamma_, beta_, seg_)

        # Unfold (free), drop any G-padding, then the module's final view().
        out2d = out_f.reshape(rows_p, emb_size)
        if rows_p != rows:
            out2d = out2d[:rows]
        return out2d.reshape(-1, seq_length * emb_size)

    return apply


def reference(x, w1, b1, w2, b2, gamma, beta, *, seq_length, emb_size):
    h = jnp.maximum(x @ w1 + b1, 0.0)
    y = h @ w2 + b2
    mean = jnp.mean(y, axis=-1, keepdims=True)
    var = jnp.mean((y - mean) ** 2, axis=-1, keepdims=True)
    y = (y - mean) / jnp.sqrt(var + 1e-5) * gamma + beta
    return y.reshape(-1, seq_length * emb_size)


if __name__ == "__main__":
    # Small shapes consistent with FeatureExtractor(seq_length, num_words,
    # hidden_size, emb_size).
    batch, seq_length, num_words, hidden_size, emb_size = 8, 8, 32, 64, 32

    key = jax.random.PRNGKey(0)
    kx, k1, k2, k3, k4 = jax.random.split(key, 5)

    x = jax.random.normal(kx, (batch, seq_length, num_words), dtype=jnp.float32)

    # Deterministic parameter init (uniform, similar scale to PyTorch default).
    lim1 = 1.0 / jnp.sqrt(num_words)
    lim2 = 1.0 / jnp.sqrt(hidden_size)
    w1 = jax.random.uniform(k1, (num_words, hidden_size), jnp.float32, -lim1, lim1)
    b1 = jax.random.uniform(k2, (hidden_size,), jnp.float32, -lim1, lim1)
    w2 = jax.random.uniform(k3, (hidden_size, emb_size), jnp.float32, -lim2, lim2)
    b2 = jax.random.uniform(k4, (emb_size,), jnp.float32, -lim2, lim2)
    gamma = jnp.ones((emb_size,), jnp.float32)   # nn.LayerNorm weight init
    beta = jnp.zeros((emb_size,), jnp.float32)   # nn.LayerNorm bias init

    fe = make_feature_extractor(w1, b1, w2, b2, gamma, beta,
                                seq_length=seq_length, emb_size=emb_size)
    out = jax.block_until_ready(fe(x))

    ref = reference(x, w1, b1, w2, b2, gamma, beta,
                    seq_length=seq_length, emb_size=emb_size)
    assert out.shape == (batch, seq_length * emb_size), out.shape

    # bf16 matmul inputs + bf16 output (per the perf review) => bf16-level
    # tolerance; structural bugs would produce O(1) errors, not ~1e-2.
    diff = jnp.abs(out.astype(jnp.float32) - ref)
    max_err = float(jnp.max(diff))
    mean_err = float(jnp.mean(diff))
    assert max_err < 1e-1, max_err
    assert mean_err < 2e-2, mean_err

    print("KERNEL_OK")
</pallas_src>

<mosaic_0001>
module attributes {stable_mosaic.version = 11 : i64} {
  func.func @feature_extractor_kernel(%arg0: i32, %arg1: memref<8x128xf32, #tpu.memory_space<vmem>>, %arg2: memref<128x256xbf16, #tpu.memory_space<vmem>>, %arg3: memref<1x256xf32, #tpu.memory_space<vmem>>, %arg4: memref<256x256xbf16, #tpu.memory_space<vmem>>, %arg5: memref<1x256xf32, #tpu.memory_space<vmem>>, %arg6: memref<1x128xf32, #tpu.memory_space<vmem>>, %arg7: memref<1x128xf32, #tpu.memory_space<vmem>>, %arg8: memref<128x128xbf16, #tpu.memory_space<vmem>>, %arg9: memref<8x128xbf16, #tpu.memory_space<vmem>>) attributes {dimension_semantics = [#tpu.dimension_semantics<parallel>], iteration_bounds = array<i64: 2>, scalar_prefetch = 0 : i64, scratch_operands = 0 : i64, tpu.core_type = #tpu.core_type<tc>, window_params = [{transform_indices = @transform_0, window_bounds = array<i64: 8, 128>}, {pipeline_mode = #tpu.pipeline_mode<synchronous>, transform_indices = @transform_1, window_bounds = array<i64: 128, 256>}, {pipeline_mode = #tpu.pipeline_mode<synchronous>, transform_indices = @transform_2, window_bounds = array<i64: 1, 256>}, {pipeline_mode = #tpu.pipeline_mode<synchronous>, transform_indices = @transform_3, window_bounds = array<i64: 256, 256>}, {pipeline_mode = #tpu.pipeline_mode<synchronous>, transform_indices = @transform_4, window_bounds = array<i64: 1, 256>}, {pipeline_mode = #tpu.pipeline_mode<synchronous>, transform_indices = @transform_5, window_bounds = array<i64: 1, 128>}, {pipeline_mode = #tpu.pipeline_mode<synchronous>, transform_indices = @transform_6, window_bounds = array<i64: 1, 128>}, {pipeline_mode = #tpu.pipeline_mode<synchronous>, transform_indices = @transform_7, window_bounds = array<i64: 128, 128>}, {transform_indices = @transform_8, window_bounds = array<i64: 8, 128>}]} {
    %c0 = arith.constant 0 : index
    %c0_0 = arith.constant 0 : index
    %0 = vector.load %arg1[%c0, %c0_0] : memref<8x128xf32, #tpu.memory_space<vmem>>, vector<8x128xf32>
    %1 = arith.truncf %0 : vector<8x128xf32> to vector<8x128xbf16>
    %c0_1 = arith.constant 0 : index
    %c0_2 = arith.constant 0 : index
    %2 = vector.load %arg2[%c0_1, %c0_2] : memref<128x256xbf16, #tpu.memory_space<vmem>>, vector<128x256xbf16>
    %cst = arith.constant dense<0.000000e+00> : vector<8x256xf32>
    %3 = tpu.matmul %1, %2, %cst {dimension_numbers = #tpu.dot_dimension_numbers<[1], [0], [0], [1], [0, 0, 1, 1], [], []>} : vector<8x128xbf16>, vector<128x256xbf16>, vector<8x256xf32> -> vector<8x256xf32>
    %c0_3 = arith.constant 0 : index
    %c0_4 = arith.constant 0 : index
    %4 = vector.load %arg3[%c0_3, %c0_4] : memref<1x256xf32, #tpu.memory_space<vmem>>, vector<1x256xf32>
    %5 = vector.broadcast %4 : vector<1x256xf32> to vector<8x256xf32>
    %6 = arith.addf %3, %5 : vector<8x256xf32>
    %cst_5 = arith.constant 0.000000e+00 : f32
    %7 = vector.broadcast %cst_5 : f32 to vector<8x256xf32>
    %8 = arith.maximumf %6, %7 : vector<8x256xf32>
    %9 = arith.truncf %8 : vector<8x256xf32> to vector<8x256xbf16>
    %c0_6 = arith.constant 0 : index
    %c0_7 = arith.constant 0 : index
    %10 = vector.load %arg4[%c0_6, %c0_7] : memref<256x256xbf16, #tpu.memory_space<vmem>>, vector<256x256xbf16>
    %cst_8 = arith.constant dense<0.000000e+00> : vector<8x256xf32>
    %11 = tpu.matmul %9, %10, %cst_8 {dimension_numbers = #tpu.dot_dimension_numbers<[1], [0], [0], [1], [0, 0, 1, 1], [], []>} : vector<8x256xbf16>, vector<256x256xbf16>, vector<8x256xf32> -> vector<8x256xf32>
    %c0_9 = arith.constant 0 : index
    %c0_10 = arith.constant 0 : index
    %12 = vector.load %arg5[%c0_9, %c0_10] : memref<1x256xf32, #tpu.memory_space<vmem>>, vector<1x256xf32>
    %13 = vector.broadcast %12 : vector<1x256xf32> to vector<8x256xf32>
    %14 = arith.addf %11, %13 : vector<8x256xf32>
    %15 = vector.extract_strided_slice %14 {offsets = [0, 0], sizes = [8, 128], strides = [1, 1]} : vector<8x256xf32> to vector<8x128xf32>
    %16 = vector.extract_strided_slice %14 {offsets = [0, 128], sizes = [8, 128], strides = [1, 1]} : vector<8x256xf32> to vector<8x128xf32>
    %17 = arith.subf %15, %16 : vector<8x128xf32>
    %18 = arith.mulf %17, %17 : vector<8x128xf32>
    %19 = arith.truncf %18 : vector<8x128xf32> to vector<8x128xbf16>
    %20 = arith.extf %19 : vector<8x128xbf16> to vector<8x128xf32>
    %21 = arith.subf %18, %20 : vector<8x128xf32>
    %22 = arith.truncf %21 : vector<8x128xf32> to vector<8x128xbf16>
    %c0_11 = arith.constant 0 : index
    %c0_12 = arith.constant 0 : index
    %23 = vector.load %arg8[%c0_11, %c0_12] : memref<128x128xbf16, #tpu.memory_space<vmem>>, vector<128x128xbf16>
    %cst_13 = arith.constant dense<0.000000e+00> : vector<8x128xf32>
    %24 = tpu.matmul %19, %23, %cst_13 {dimension_numbers = #tpu.dot_dimension_numbers<[1], [0], [0], [1], [0, 0, 1, 1], [], []>} : vector<8x128xbf16>, vector<128x128xbf16>, vector<8x128xf32> -> vector<8x128xf32>
    %c0_14 = arith.constant 0 : index
    %c0_15 = arith.constant 0 : index
    %25 = vector.load %arg8[%c0_14, %c0_15] : memref<128x128xbf16, #tpu.memory_space<vmem>>, vector<128x128xbf16>
    %cst_16 = arith.constant dense<0.000000e+00> : vector<8x128xf32>
    %26 = tpu.matmul %22, %25, %cst_16 {dimension_numbers = #tpu.dot_dimension_numbers<[1], [0], [0], [1], [0, 0, 1, 1], [], []>} : vector<8x128xbf16>, vector<128x128xbf16>, vector<8x128xf32> -> vector<8x128xf32>
    %27 = arith.addf %24, %26 : vector<8x128xf32>
    %cst_17 = arith.constant 9.99999974E-6 : f32
    %28 = vector.broadcast %cst_17 : f32 to vector<8x128xf32>
    %29 = arith.addf %27, %28 : vector<8x128xf32>
    %30 = math.rsqrt %29 : vector<8x128xf32>
    %31 = arith.mulf %17, %30 : vector<8x128xf32>
    %c0_18 = arith.constant 0 : index
    %c0_19 = arith.constant 0 : index
    %32 = vector.load %arg6[%c0_18, %c0_19] : memref<1x128xf32, #tpu.memory_space<vmem>>, vector<1x128xf32>
    %33 = vector.broadcast %32 : vector<1x128xf32> to vector<8x128xf32>
    %34 = arith.mulf %31, %33 : vector<8x128xf32>
    %c0_20 = arith.constant 0 : index
    %c0_21 = arith.constant 0 : index
    %35 = vector.load %arg7[%c0_20, %c0_21] : memref<1x128xf32, #tpu.memory_space<vmem>>, vector<1x128xf32>
    %36 = vector.broadcast %35 : vector<1x128xf32> to vector<8x128xf32>
    %37 = arith.addf %34, %36 : vector<8x128xf32>
    %38 = arith.truncf %37 : vector<8x128xf32> to vector<8x128xbf16>
    %c0_22 = arith.constant 0 : index
    %c0_23 = arith.constant 0 : index
    %39 = vector.load %arg9[%c0_22, %c0_23] : memref<8x128xbf16, #tpu.memory_space<vmem>>, vector<8x128xbf16>
    tpu.vector_store %arg9[%c0_22, %c0_23], %38 {strides = array<i32>} : memref<8x128xbf16, #tpu.memory_space<vmem>>, vector<8x128xbf16>,
    return
  }
  func.func @transform_0(%arg0: i32) -> (i32, i32) {
    %c0_i32 = arith.constant 0 : i32
    %c0_i32_0 = arith.constant 0 : i32
    return %arg0, %c0_i32 : i32, i32
  }
  func.func @transform_1(%arg0: i32) -> (i32, i32) {
    %c0_i32 = arith.constant 0 : i32
    %c0_i32_0 = arith.constant 0 : i32
    %c0_i32_1 = arith.constant 0 : i32
    return %c0_i32, %c0_i32_0 : i32, i32
  }
  func.func @transform_2(%arg0: i32) -> (i32, i32) {
    %c0_i32 = arith.constant 0 : i32
    %c0_i32_0 = arith.constant 0 : i32
    %c0_i32_1 = arith.constant 0 : i32
    return %c0_i32, %c0_i32_0 : i32, i32
  }
  func.func @transform_3(%arg0: i32) -> (i32, i32) {
    %c0_i32 = arith.constant 0 : i32
    %c0_i32_0 = arith.constant 0 : i32
    %c0_i32_1 = arith.constant 0 : i32
    return %c0_i32, %c0_i32_0 : i32, i32
  }
  func.func @transform_4(%arg0: i32) -> (i32, i32) {
    %c0_i32 = arith.constant 0 : i32
    %c0_i32_0 = arith.constant 0 : i32
    %c0_i32_1 = arith.constant 0 : i32
    return %c0_i32, %c0_i32_0 : i32, i32
  }
  func.func @transform_5(%arg0: i32) -> (i32, i32) {
    %c0_i32 = arith.constant 0 : i32
    %c0_i32_0 = arith.constant 0 : i32
    %c0_i32_1 = arith.constant 0 : i32
    return %c0_i32, %c0_i32_0 : i32, i32
  }
  func.func @transform_6(%arg0: i32) -> (i32, i32) {
    %c0_i32 = arith.constant 0 : i32
    %c0_i32_0 = arith.constant 0 : i32
    %c0_i32_1 = arith.constant 0 : i32
    return %c0_i32, %c0_i32_0 : i32, i32
  }
  func.func @transform_7(%arg0: i32) -> (i32, i32) {
    %c0_i32 = arith.constant 0 : i32
    %c0_i32_0 = arith.constant 0 : i32
    %c0_i32_1 = arith.constant 0 : i32
    return %c0_i32, %c0_i32_0 : i32, i32
  }
  func.func @transform_8(%arg0: i32) -> (i32, i32) {
    %c0_i32 = arith.constant 0 : i32
    %c0_i32_0 = arith.constant 0 : i32
    return %arg0, %c0_i32 : i32, i32
  }
}

</mosaic_0001>

<llo_original>
// kernel: apply.1
$region0: #{apply.1}
  #allocation0 [shape = 'u32[]', space=smem, size = 0x4, offset = 0x4, fixed_abs, tag = 'smem constant byte address 0x4 - core index']
  #allocation1 [shape = 'u32[144,128]{1,0:T(1,128)}', space=vmem, size = 0x12000, scoped, tag = 'internal scratch']
  %s0 = inlined_call_operand.vmem [shape: f32[16,128], index: 0, kind: input, shape index: {}]
  %s1 = inlined_call_operand.hbm [shape: bf16[128,256], index: 1, kind: input, shape index: {}]
  %s2 = inlined_call_operand.vmem [shape: f32[1,256], index: 2, kind: input, shape index: {}]
  %s3 = inlined_call_operand.hbm [shape: bf16[256,256], index: 3, kind: input, shape index: {}]
  %s4 = inlined_call_operand.vmem [shape: f32[1,256], index: 4, kind: input, shape index: {}]
  %s5 = inlined_call_operand.vmem [shape: f32[1,128], index: 5, kind: input, shape index: {}]
  %s6 = inlined_call_operand.vmem [shape: f32[1,128], index: 6, kind: input, shape index: {}]
  %s7 = inlined_call_operand.vmem [shape: bf16[128,128], index: 7, kind: input, shape index: {}]
  %s8 = inlined_call_operand.vmem [shape: bf16[16,128], index: 8, kind: output, shape index: {}]
  %s9 = sld [smem:[#allocation0]]
  $region73: #{apply.1} parent=0
    _
  %s11 = ssub.s32 1, %s9
  %s12 = scalar_select 0, %s11, %s9
  $region1: #{apply.1} parent=0
    #allocation2 [shape = 'u8[65536]{0}', space=vmem, size = 0x10000, scoped, tag = 'input window, operand 1, single buffered']
    #allocation3 [shape = 's32[2]{0}', space=sflag, size = 0x8, scoped, tag = 'scoped memory for apply.1']
    #allocation4 [shape = 'u8[131072]{0}', space=vmem, size = 0x20000, scoped, tag = 'input window, operand 3, single buffered']
    #allocation5 [shape = 's32[1]{0}', space=sflag, size = 0x4, scoped, tag = 'scoped memory for apply.1']
    %13 = vsyncpa [#allocation3], 0
    %14 = vsyncpa [#allocation5], 0
    loop: start=0, step=1, limit=4
    $region2: #{apply.1} parent=1 // loop_pre_header
      _
    $region3: #{apply.1} parent=1 // loop_header
      %s16 = sphi 0, %s20
      %p17 = scmp.ge.s32.totalorder %s16, 4
      %s26 = sphi 0, %s28
      %s29 = sphi 0, %s26
      %s30 = sphi 0, %s29
      %s46 = sphi 0, %s30
      %s50 = sphi 0, %s50
      %s52 = sphi 0, %s50
      %s53 = sphi 0, %s52
      %s67 = sphi 0, %s53
      %s71 = sphi 0, %s71
      %s73 = sphi 0, %s71
      %s74 = sphi 0, %s73
      %s88 = sphi 0, %s74
      %s92 = sphi 0, %s92
      %s94 = sphi 0, %s92
      %s95 = sphi 0, %s94
      %s109 = sphi 0, %s95
      %s113 = sphi 0, %s113
      %s115 = sphi 0, %s113
      %s116 = sphi 0, %s115
      %s130 = sphi 0, %s116
      %s134 = sphi 0, %s134
      %s136 = sphi 0, %s134
      %s137 = sphi 0, %s136
      %s151 = sphi 0, %s137
      %s155 = sphi 0, %s155
      %s157 = sphi 0, %s155
      %s158 = sphi 0, %s157
      %s172 = sphi 0, %s158
      %s176 = sphi 0, %s176
      %s178 = sphi 0, %s176
      %s179 = sphi 0, %s178
      %s193 = sphi 0, %s179
      %s199 = sphi 0, %s201
      %s202 = sphi 0, %s199
      %s203 = sphi 0, %s202
      %s219 = sphi 0, %s203
    $region4: #{apply.1} parent=1 // loop_header_branch
      %19 = sbr.rel (%p17) target = $region8
    $region5: #{apply.1} parent=1 // loop_body
      %s21 = ssub.s32 %s16, 1
      %s22 = ssub.s32 %s16, 2
      %s23 = sadd.s32 %s16, 1
      %s24 = ssub.s32 %s16, %s23
      %p25 = scmp.eq.s32.totalorder %s24, 0
      %s27 = sadd.s32 %s26, 1
      %s28 = scalar_select %p25, %s26, %s27
      %p31 = pneg %p25
      %p32 = scmp.eq.s32.totalorder %s16, 1
      %p33 = por %p31, %p32
      %p34 = scmp.ne.s32.totalorder %s26, %s29
      %p35 = scmp.eq.s32.totalorder %s16, 0
      %p36 = por %p34, %p35
      %p37 = scmp.ne.s32.totalorder %s26, %s29
      %p38 = scmp.eq.s32.totalorder %s21, 1
      %p39 = por %p37, %p38
      %p40 = scmp.ne.s32.totalorder %s29, %s30
      %p41 = scmp.eq.s32.totalorder %s21, 0
      %p42 = por %p40, %p41
      %p43 = scmp.ne.s32.totalorder %s29, %s30
      %p44 = scmp.eq.s32.totalorder %s22, 1
      %p45 = por %p43, %p44
      %p47 = scmp.ne.s32.totalorder %s30, %s46
      %p48 = scmp.eq.s32.totalorder %s22, 0
      %p49 = por %p47, %p48
      %s51 = sadd.s32 %s50, 1
      %p54 = scmp.eq.s32.totalorder %s16, 1
      %p55 = scmp.ne.s32.totalorder %s50, %s52
      %p56 = scmp.eq.s32.totalorder %s16, 0
      %p57 = por %p55, %p56
      %p58 = scmp.ne.s32.totalorder %s50, %s52
      %p59 = scmp.eq.s32.totalorder %s21, 1
      %p60 = por %p58, %p59
      %p61 = scmp.ne.s32.totalorder %s52, %s53
      %p62 = scmp.eq.s32.totalorder %s21, 0
      %p63 = por %p61, %p62
      %p64 = scmp.ne.s32.totalorder %s52, %s53
      %p65 = scmp.eq.s32.totalorder %s22, 1
      %p66 = por %p64, %p65
      %p68 = scmp.ne.s32.totalorder %s53, %s67
      %p69 = scmp.eq.s32.totalorder %s22, 0
      %p70 = por %p68, %p69
      %s72 = sadd.s32 %s71, 1
      %p75 = scmp.eq.s32.totalorder %s16, 1
      %p76 = scmp.ne.s32.totalorder %s71, %s73
      %p77 = scmp.eq.s32.totalorder %s16, 0
      %p78 = por %p76, %p77
      %p79 = scmp.ne.s32.totalorder %s71, %s73
      %p80 = scmp.eq.s32.totalorder %s21, 1
      %p81 = por %p79, %p80
      %p82 = scmp.ne.s32.totalorder %s73, %s74
      %p83 = scmp.eq.s32.totalorder %s21, 0
      %p84 = por %p82, %p83
      %p85 = scmp.ne.s32.totalorder %s73, %s74
      %p86 = scmp.eq.s32.totalorder %s22, 1
      %p87 = por %p85, %p86
      %p89 = scmp.ne.s32.totalorder %s74, %s88
      %p90 = scmp.eq.s32.totalorder %s22, 0
      %p91 = por %p89, %p90
      %s93 = sadd.s32 %s92, 1
      %p96 = scmp.eq.s32.totalorder %s16, 1
      %p97 = scmp.ne.s32.totalorder %s92, %s94
      %p98 = scmp.eq.s32.totalorder %s16, 0
      %p99 = por %p97, %p98
      %p100 = scmp.ne.s32.totalorder %s92, %s94
      %p101 = scmp.eq.s32.totalorder %s21, 1
      %p102 = por %p100, %p101
      %p103 = scmp.ne.s32.totalorder %s94, %s95
      %p104 = scmp.eq.s32.totalorder %s21, 0
      %p105 = por %p103, %p104
      %p106 = scmp.ne.s32.totalorder %s94, %s95
      %p107 = scmp.eq.s32.totalorder %s22, 1
      %p108 = por %p106, %p107
      %p110 = scmp.ne.s32.totalorder %s95, %s109
      %p111 = scmp.eq.s32.totalorder %s22, 0
      %p112 = por %p110, %p111
      %s114 = sadd.s32 %s113, 1
      %p117 = scmp.eq.s32.totalorder %s16, 1
      %p118 = scmp.ne.s32.totalorder %s113, %s115
      %p119 = scmp.eq.s32.totalorder %s16, 0
      %p120 = por %p118, %p119
      %p121 = scmp.ne.s32.totalorder %s113, %s115
      %p122 = scmp.eq.s32.totalorder %s21, 1
      %p123 = por %p121, %p122
      %p124 = scmp.ne.s32.totalorder %s115, %s116
      %p125 = scmp.eq.s32.totalorder %s21, 0
      %p126 = por %p124, %p125
      %p127 = scmp.ne.s32.totalorder %s115, %s116
      %p128 = scmp.eq.s32.totalorder %s22, 1
      %p129 = por %p127, %p128
      %p131 = scmp.ne.s32.totalorder %s116, %s130
      %p132 = scmp.eq.s32.totalorder %s22, 0
      %p133 = por %p131, %p132
      %s135 = sadd.s32 %s134, 1
      %p138 = scmp.eq.s32.totalorder %s16, 1
      %p139 = scmp.ne.s32.totalorder %s134, %s136
      %p140 = scmp.eq.s32.totalorder %s16, 0
      %p141 = por %p139, %p140
      %p142 = scmp.ne.s32.totalorder %s134, %s136
      %p143 = scmp.eq.s32.totalorder %s21, 1
      %p144 = por %p142, %p143
      %p145 = scmp.ne.s32.totalorder %s136, %s137
      %p146 = scmp.eq.s32.totalorder %s21, 0
      %p147 = por %p145, %p146
      %p148 = scmp.ne.s32.totalorder %s136, %s137
      %p149 = scmp.eq.s32.totalorder %s22, 1
      %p150 = por %p148, %p149
      %p152 = scmp.ne.s32.totalorder %s137, %s151
      %p153 = scmp.eq.s32.totalorder %s22, 0
      %p154 = por %p152, %p153
      %s156 = sadd.s32 %s155, 1
      %p159 = scmp.eq.s32.totalorder %s16, 1
      %p160 = scmp.ne.s32.totalorder %s155, %s157
      %p161 = scmp.eq.s32.totalorder %s16, 0
      %p162 = por %p160, %p161
      %p163 = scmp.ne.s32.totalorder %s155, %s157
      %p164 = scmp.eq.s32.totalorder %s21, 1
      %p165 = por %p163, %p164
      %p166 = scmp.ne.s32.totalorder %s157, %s158
      %p167 = scmp.eq.s32.totalorder %s21, 0
      %p168 = por %p166, %p167
      %p169 = scmp.ne.s32.totalorder %s157, %s158
      %p170 = scmp.eq.s32.totalorder %s22, 1
      %p171 = por %p169, %p170
      %p173 = scmp.ne.s32.totalorder %s158, %s172
      %p174 = scmp.eq.s32.totalorder %s22, 0
      %p175 = por %p173, %p174
      %s177 = sadd.s32 %s176, 1
      %p180 = scmp.eq.s32.totalorder %s16, 1
      %p181 = scmp.ne.s32.totalorder %s176, %s178
      %p182 = scmp.eq.s32.totalorder %s16, 0
      %p183 = por %p181, %p182
      %p184 = scmp.ne.s32.totalorder %s176, %s178
      %p185 = scmp.eq.s32.totalorder %s21, 1
      %p186 = por %p184, %p185
      %p187 = scmp.ne.s32.totalorder %s178, %s179
      %p188 = scmp.eq.s32.totalorder %s21, 0
      %p189 = por %p187, %p188
      %p190 = scmp.ne.s32.totalorder %s178, %s179
      %p191 = scmp.eq.s32.totalorder %s22, 1
      %p192 = por %p190, %p191
      %p194 = scmp.ne.s32.totalorder %s179, %s193
      %p195 = scmp.eq.s32.totalorder %s22, 0
      %p196 = por %p194, %p195
      %s197 = ssub.s32 %s16, %s23
      %p198 = scmp.eq.s32.totalorder %s197, 0
      %s200 = sadd.s32 %s199, 1
      %s201 = scalar_select %p198, %s199, %s200
      %p204 = pneg %p198
      %p205 = scmp.eq.s32.totalorder %s16, 1
      %p206 = por %p204, %p205
      %p207 = scmp.ne.s32.totalorder %s199, %s202
      %p208 = scmp.eq.s32.totalorder %s16, 0
      %p209 = por %p207, %p208
      %p210 = scmp.ne.s32.totalorder %s199, %s202
      %p211 = scmp.eq.s32.totalorder %s21, 1
      %p212 = por %p210, %p211
      %p213 = scmp.ne.s32.totalorder %s202, %s203
      %p214 = scmp.eq.s32.totalorder %s21, 0
      %p215 = por %p213, %p214
      %p216 = scmp.ne.s32.totalorder %s202, %s203
      %p217 = scmp.eq.s32.totalorder %s22, 1
      %p218 = por %p216, %p217
      %p220 = scmp.ne.s32.totalorder %s203, %s219
      %p221 = scmp.eq.s32.totalorder %s22, 0
      %p222 = por %p220, %p221
      %p223 = scmp.le.s32.totalorder 1, %s16
      %p224 = scmp.lt.s32.totalorder %s16, 3
      %p225 = pnand %p223, %p224
      %p226 = pneg %p225
      // Predicated region
      $region9: #{apply.1} parent=5 // pred_check
        _
      $region10: #{apply.1} parent=5 // pred_check_branch
        %228 = sbr.rel (%p225) target = $region12
      $region11: #{apply.1} parent=5 // pred_region
        %s229 = ssub.s32 %s16, 1
        // Predicated region
        $region13: #{apply.1} parent=11 // pred_check
          %p230 = pneg %p63
        $region14: #{apply.1} parent=11 // pred_check_branch
          %232 = sbr.rel (%p230) target = $region16
        $region15: #{apply.1} parent=11 // pred_region
          %s234 = ssub.s32 2048, 2048
          %235 = vsyncadd [#allocation3], %s234
          %s236 = sshll.u32 [#allocation2], 4
          %s237 = int_to_ptr.vmem [resolvable:$true] %s236
          %242 = dma.hbm_to_vmem [thread:$0]  %s1, 2048, %s237, [#allocation3], 128, 128, 8
        $region16: #{apply.1} parent=11 // pred_fallthru
          _
        // Predicated region
        $region17: #{apply.1} parent=11 // pred_check
          %p243 = pneg %p84
        $region18: #{apply.1} parent=11 // pred_check_branch
          %245 = sbr.rel (%p243) target = $region20
        $region19: #{apply.1} parent=11 // pred_region
          _
        $region20: #{apply.1} parent=11 // pred_fallthru
          _
        // Predicated region
        $region21: #{apply.1} parent=11 // pred_check
          %p246 = pneg %p105
        $region22: #{apply.1} parent=11 // pred_check_branch
          %248 = sbr.rel (%p246) target = $region24
        $region23: #{apply.1} parent=11 // pred_region
          %s250 = ssub.s32 4096, 4096
          %251 = vsyncadd [#allocation5], %s250
          %s252 = sshll.u32 [#allocation4], 4
          %s253 = int_to_ptr.vmem [resolvable:$true] %s252
          %258 = dma.hbm_to_vmem [thread:$0]  %s3, 4096, %s253, [#allocation5], 128, 128, 8
        $region24: #{apply.1} parent=11 // pred_fallthru
          _
        // Predicated region
        $region25: #{apply.1} parent=11 // pred_check
          %p259 = pneg %p126
        $region26: #{apply.1} parent=11 // pred_check_branch
          %261 = sbr.rel (%p259) target = $region28
        $region27: #{apply.1} parent=11 // pred_region
          _
        $region28: #{apply.1} parent=11 // pred_fallthru
          _
        // Predicated region
        $region29: #{apply.1} parent=11 // pred_check
          %p262 = pneg %p147
        $region30: #{apply.1} parent=11 // pred_check_branch
          %264 = sbr.rel (%p262) target = $region32
        $region31: #{apply.1} parent=11 // pred_region
          _
        $region32: #{apply.1} parent=11 // pred_fallthru
          _
        // Predicated region
        $region33: #{apply.1} parent=11 // pred_check
          %p265 = pneg %p168
        $region34: #{apply.1} parent=11 // pred_check_branch
          %267 = sbr.rel (%p265) target = $region36
        $region35: #{apply.1} parent=11 // pred_region
          _
        $region36: #{apply.1} parent=11 // pred_fallthru
          _
        // Predicated region
        $region37: #{apply.1} parent=11 // pred_check
          %p268 = pneg %p189
        $region38: #{apply.1} parent=11 // pred_check_branch
          %270 = sbr.rel (%p268) target = $region40
        $region39: #{apply.1} parent=11 // pred_region
          _
        $region40: #{apply.1} parent=11 // pred_fallthru
          _
      $region12: #{apply.1} parent=5 // pred_fallthru
        _
      %p271 = scmp.lt.s32.totalorder %s16, 2
      // Predicated region
      $region41: #{apply.1} parent=5 // pred_check
        %p272 = pneg %p271
      $region42: #{apply.1} parent=5 // pred_check_branch
        %274 = sbr.rel (%p272) target = $region44
      $region43: #{apply.1} parent=5 // pred_region
        // Predicated region
        $region45: #{apply.1} parent=43 // pred_check
          %p275 = pneg %p36
        $region46: #{apply.1} parent=43 // pred_check_branch
          %277 = sbr.rel (%p275) target = $region48
        $region47: #{apply.1} parent=43 // pred_region
          %p278 = scmp.lt.s32.totalorder %s16, 1
          %s279 = scalar_select %p278, %s16, 1
          %s280 = smul.addr %s279, 8
          %s281 = scalar_lea.vmem %s0, %s280
        $region48: #{apply.1} parent=43 // pred_fallthru
          _
      $region44: #{apply.1} parent=5 // pred_fallthru
        _
      %p282 = scmp.le.s32.totalorder 1, %s16
      %p283 = scmp.lt.s32.totalorder %s16, 3
      %p284 = pnand %p282, %p283
      %p285 = pneg %p284
      // Predicated region
      $region49: #{apply.1} parent=5 // pred_check
        _
      $region50: #{apply.1} parent=5 // pred_check_branch
        %287 = sbr.rel (%p284) target = $region52
      $region51: #{apply.1} parent=5 // pred_region
        %s288 = ssub.s32 %s16, 1
        // Predicated region
        $region53: #{apply.1} parent=51 // pred_check
          %p289 = pneg %p63
        $region54: #{apply.1} parent=51 // pred_check_branch
          %291 = sbr.rel (%p289) target = $region56
        $region55: #{apply.1} parent=51 // pred_region
          %292 = dma.done [#allocation3], 2048
        $region56: #{apply.1} parent=51 // pred_fallthru
          _
        // Predicated region
        $region57: #{apply.1} parent=51 // pred_check
          %p293 = pneg %p105
        $region58: #{apply.1} parent=51 // pred_check_branch
          %295 = sbr.rel (%p293) target = $region60
        $region59: #{apply.1} parent=51 // pred_region
          %296 = dma.done [#allocation5], 4096
        $region60: #{apply.1} parent=51 // pred_fallthru
          _
        %p297 = scmp.lt.s32.totalorder %s21, 1
        %s298 = scalar_select %p297, %s21, 1
        %s299 = smul.addr %s298, 8
        %s300 = scalar_lea.vmem %s0, %s299
        %p301 = pneg %p42
        %p302 = pneg %p39
        %p303 = pneg %p63
        %p304 = pneg %p60
        %p305 = pneg %p84
        %p306 = pneg %p81
        %p307 = pneg %p105
        %p308 = pneg %p102
        %p309 = pneg %p126
        %p310 = pneg %p123
        %p311 = pneg %p147
        %p312 = pneg %p144
        %p313 = pneg %p168
        %p314 = pneg %p165
        %p315 = pneg %p189
        %p316 = pneg %p186
        %p317 = pneg %p215
        %p318 = pneg %p212
        %p319 = scmp.lt.s32.totalorder %s21, 1
        %s320 = scalar_select %p319, %s21, 1
        %s321 = smul.addr %s320, 4
        %s322 = scalar_lea.vmem %s8, %s321
        %p323 = scmp.lt.s32.totalorder %s21, 1
        %s324 = scalar_select %p323, %s21, 1
        %s325 = smul.addr %s324, 8
        %s326 = scalar_lea.vmem %s0, %s325
        %p327 = scmp.lt.s32.totalorder %s21, 1
        %s328 = scalar_select %p327, %s21, 1
        %s329 = smul.addr %s328, 4
        %s330 = scalar_lea.vmem %s8, %s329
        %v332 = vld [vmem:[%s326] sm:$0xff]
        %v333 = vpack.c.bf16 %v332, %v332
        %v334 = vld [vmem:[#allocation2] sm:$0xff]
        %v335 = vld [vmem:[#allocation2 + $0x8] sm:$0xff]
        %v336 = vld [vmem:[#allocation2 + $0x10] sm:$0xff]
        %v337 = vld [vmem:[#allocation2 + $0x18] sm:$0xff]
        %v338 = vld [vmem:[#allocation2 + $0x20] sm:$0xff]
        %v339 = vld [vmem:[#allocation2 + $0x28] sm:$0xff]
        %v340 = vld [vmem:[#allocation2 + $0x30] sm:$0xff]
        %v341 = vld [vmem:[#allocation2 + $0x38] sm:$0xff]
        %v342 = vld [vmem:[#allocation2 + $0x40] sm:$0xff]
        %v343 = vld [vmem:[#allocation2 + $0x48] sm:$0xff]
        %v344 = vld [vmem:[#allocation2 + $0x50] sm:$0xff]
        %v345 = vld [vmem:[#allocation2 + $0x58] sm:$0xff]
        %v346 = vld [vmem:[#allocation2 + $0x60] sm:$0xff]
        %v347 = vld [vmem:[#allocation2 + $0x68] sm:$0xff]
        %v348 = vld [vmem:[#allocation2 + $0x70] sm:$0xff]
        %v349 = vld [vmem:[#allocation2 + $0x78] sm:$0xff]
        %v350 = vld [vmem:[%s2] sm:$0x3]
        %v352 = vlaneseq
        %v353 = vshrl.u32 %v352, 7
        %v354 = vsub.s32 0, %v353
        %v355 = vrot.slane %v350, %v354
        %v356 = vlaneseq
        %v357 = vshrl.u32 %v356, 7
        %v358 = vsub.s32 1, %v357
        %v359 = vrot.slane %v350, %v358
        %v378 = vunpack.c.l.b16 %v334
        %v379 = vunpack.c.h.b16 %v334
        %v380 = vunpack.c.l.b16 %v335
        %v381 = vunpack.c.h.b16 %v335
        %v382 = vunpack.c.l.b16 %v336
        %v383 = vunpack.c.h.b16 %v336
        %v384 = vunpack.c.l.b16 %v337
        %v385 = vunpack.c.h.b16 %v337
        %v386 = vunpack.c.l.b16 %v338
        %v387 = vunpack.c.h.b16 %v338
        %v388 = vunpack.c.l.b16 %v339
        %v389 = vunpack.c.h.b16 %v339
        %v390 = vunpack.c.l.b16 %v340
        %v391 = vunpack.c.h.b16 %v340
        %v392 = vunpack.c.l.b16 %v341
        %v393 = vunpack.c.h.b16 %v341
        %v394 = vunpack.c.l.b16 %v342
        %v395 = vunpack.c.h.b16 %v342
        %v396 = vunpack.c.l.b16 %v343
        %v397 = vunpack.c.h.b16 %v343
        %v398 = vunpack.c.l.b16 %v344
        %v399 = vunpack.c.h.b16 %v344
        %v400 = vunpack.c.l.b16 %v345
        %v401 = vunpack.c.h.b16 %v345
        %v402 = vunpack.c.l.b16 %v346
        %v403 = vunpack.c.h.b16 %v346
        %v404 = vunpack.c.l.b16 %v347
        %v405 = vunpack.c.h.b16 %v347
        %v406 = vunpack.c.l.b16 %v348
        %v407 = vunpack.c.h.b16 %v348
        %v408 = vunpack.c.l.b16 %v349
        %v409 = vunpack.c.h.b16 %v349
        %v410 = vpack.c.b16 %v380, %v378
        %v411 = vpack.c.b16 %v381, %v379
        %v412 = vpack.c.b16 %v384, %v382
        %v413 = vpack.c.b16 %v385, %v383
        %v414 = vpack.c.b16 %v388, %v386
        %v415 = vpack.c.b16 %v389, %v387
        %v416 = vpack.c.b16 %v392, %v390
        %v417 = vpack.c.b16 %v393, %v391
        %v418 = vpack.c.b16 %v396, %v394
        %v419 = vpack.c.b16 %v397, %v395
        %v420 = vpack.c.b16 %v400, %v398
        %v421 = vpack.c.b16 %v401, %v399
        %v422 = vpack.c.b16 %v404, %v402
        %v423 = vpack.c.b16 %v405, %v403
        %v424 = vpack.c.b16 %v408, %v406
        %v425 = vpack.c.b16 %v409, %v407
        %442 = vmatprep.subr.bf16.mxu0 %v425
        %443 = vmatpush1.bf16.msra.mxu0 %v424
        %444 = vmatprep.subr.bf16.mxu0 %v423
        %445 = vmatpush1.bf16.msra.mxu0 %v422
        %446 = vmatprep.subr.bf16.mxu0 %v421
        %447 = vmatpush1.bf16.msra.mxu0 %v420
        %448 = vmatprep.subr.bf16.mxu0 %v419
        %449 = vmatpush1.bf16.msra.mxu0 %v418
        %450 = vmatprep.subr.bf16.mxu0 %v417
        %451 = vmatpush1.bf16.msra.mxu0 %v416
        %452 = vmatprep.subr.bf16.mxu0 %v415
        %453 = vmatpush1.bf16.msra.mxu0 %v414
        %454 = vmatprep.subr.bf16.mxu0 %v413
        %455 = vmatpush1.bf16.msra.mxu0 %v412
        %456 = vmatprep.subr.bf16.mxu0 %v411
        %457 = vmatpush1.bf16.msra.mxu0 %v410
        %458 = vmatprep.subr.bf16.mxu0 0
        %459 = vmatpush2.bf16.msra.mxu0 0
        %460 = vmatprep.subr.bf16.mxu0 0
        %461 = vmatpush2.bf16.msra.mxu0 0
        %462 = vmatprep.subr.bf16.mxu0 0
        %463 = vmatpush2.bf16.msra.mxu0 0
        %464 = vmatprep.subr.bf16.mxu0 0
        %465 = vmatpush2.bf16.msra.mxu0 0
        %466 = vmatprep.subr.bf16.mxu0 0
        %467 = vmatpush2.bf16.msra.mxu0 0
        %468 = vmatprep.subr.bf16.mxu0 0
        %469 = vmatpush2.bf16.msra.mxu0 0
        %470 = vmatprep.subr.bf16.mxu0 0
        %471 = vmatpush2.bf16.msra.mxu0 0
        %472 = vmatprep.subr.bf16.mxu0 0
        %473 = vmatpush2.bf16.msra.mxu0 0
        %474 = vmatprep.mubr.bf16.mxu0 0
        %475 = vmatmul.mubr.bf16.gmra.mxu0 %v333
        %v476 = vpop.f32.mrf.mxu0
        %v477 = vadd.f32 %v355, %v476
        %v478 = vpop.f32.mrf.mxu0
        %v479 = vadd.f32 %v359, %v478
        %v480 = vpop.f32.mrf.mxu0
        %v481 = vpop.f32.mrf.mxu0
        %482 = vdwg.mxu0
        %v483 = vmax.f32 %v477, 0.0
        %v484 = vmax.f32 %v479, 0.0
        %v485 = vpack.c.bf16 %v483, %v483
        %v486 = vpack.c.bf16 %v484, %v484
        %v487 = vld [vmem:[#allocation4] sm:$0xff]
        %v488 = vld [vmem:[#allocation4 + $0x8] sm:$0xff]
        %v489 = vld [vmem:[#allocation4 + $0x10] sm:$0xff]
        %v490 = vld [vmem:[#allocation4 + $0x18] sm:$0xff]
        %v491 = vld [vmem:[#allocation4 + $0x20] sm:$0xff]
        %v492 = vld [vmem:[#allocation4 + $0x28] sm:$0xff]
        %v493 = vld [vmem:[#allocation4 + $0x30] sm:$0xff]
        %v494 = vld [vmem:[#allocation4 + $0x38] sm:$0xff]
        %v495 = vld [vmem:[#allocation4 + $0x40] sm:$0xff]
        %v496 = vld [vmem:[#allocation4 + $0x48] sm:$0xff]
        %v497 = vld [vmem:[#allocation4 + $0x50] sm:$0xff]
        %v498 = vld [vmem:[#allocation4 + $0x58] sm:$0xff]
        %v499 = vld [vmem:[#allocation4 + $0x60] sm:$0xff]
        %v500 = vld [vmem:[#allocation4 + $0x68] sm:$0xff]
        %v501 = vld [vmem:[#allocation4 + $0x70] sm:$0xff]
        %v502 = vld [vmem:[#allocation4 + $0x78] sm:$0xff]
        %v503 = vld [vmem:[#allocation4 + $0x80] sm:$0xff]
        %v504 = vld [vmem:[#allocation4 + $0x88] sm:$0xff]
        %v505 = vld [vmem:[#allocation4 + $0x90] sm:$0xff]
        %v506 = vld [vmem:[#allocation4 + $0x98] sm:$0xff]
        %v507 = vld [vmem:[#allocation4 + $0xa0] sm:$0xff]
        %v508 = vld [vmem:[#allocation4 + $0xa8] sm:$0xff]
        %v509 = vld [vmem:[#allocation4 + $0xb0] sm:$0xff]
        %v510 = vld [vmem:[#allocation4 + $0xb8] sm:$0xff]
        %v511 = vld [vmem:[#allocation4 + $0xc0] sm:$0xff]
        %v512 = vld [vmem:[#allocation4 + $0xc8] sm:$0xff]
        %v513 = vld [vmem:[#allocation4 + $0xd0] sm:$0xff]
        %v514 = vld [vmem:[#allocation4 + $0xd8] sm:$0xff]
        %v515 = vld [vmem:[#allocation4 + $0xe0] sm:$0xff]
        %v516 = vld [vmem:[#allocation4 + $0xe8] sm:$0xff]
        %v517 = vld [vmem:[#allocation4 + $0xf0] sm:$0xff]
        %v518 = vld [vmem:[#allocation4 + $0xf8] sm:$0xff]
        %v519 = vld [vmem:[%s4] sm:$0x3]
        %v521 = vlaneseq
        %v522 = vshrl.u32 %v521, 7
        %v523 = vsub.s32 0, %v522
        %v524 = vrot.slane %v519, %v523
        %v525 = vlaneseq
        %v526 = vshrl.u32 %v525, 7
        %v527 = vsub.s32 1, %v526
        %v528 = vrot.slane %v519, %v527
        %v563 = vunpack.c.l.b16 %v487
        %v564 = vunpack.c.h.b16 %v487
        %v565 = vunpack.c.l.b16 %v488
        %v566 = vunpack.c.h.b16 %v488
        %v567 = vunpack.c.l.b16 %v489
        %v568 = vunpack.c.h.b16 %v489
        %v569 = vunpack.c.l.b16 %v490
        %v570 = vunpack.c.h.b16 %v490
        %v571 = vunpack.c.l.b16 %v491
        %v572 = vunpack.c.h.b16 %v491
        %v573 = vunpack.c.l.b16 %v492
        %v574 = vunpack.c.h.b16 %v492
        %v575 = vunpack.c.l.b16 %v493
        %v576 = vunpack.c.h.b16 %v493
        %v577 = vunpack.c.l.b16 %v494
        %v578 = vunpack.c.h.b16 %v494
        %v579 = vunpack.c.l.b16 %v495
        %v580 = vunpack.c.h.b16 %v495
        %v581 = vunpack.c.l.b16 %v496
        %v582 = vunpack.c.h.b16 %v496
        %v583 = vunpack.c.l.b16 %v497
        %v584 = vunpack.c.h.b16 %v497
        %v585 = vunpack.c.l.b16 %v498
        %v586 = vunpack.c.h.b16 %v498
        %v587 = vunpack.c.l.b16 %v499
        %v588 = vunpack.c.h.b16 %v499
        %v589 = vunpack.c.l.b16 %v500
        %v590 = vunpack.c.h.b16 %v500
        %v591 = vunpack.c.l.b16 %v501
        %v592 = vunpack.c.h.b16 %v501
        %v593 = vunpack.c.l.b16 %v502
        %v594 = vunpack.c.h.b16 %v502
        %v595 = vunpack.c.l.b16 %v503
        %v596 = vunpack.c.h.b16 %v503
        %v597 = vunpack.c.l.b16 %v504
        %v598 = vunpack.c.h.b16 %v504
        %v599 = vunpack.c.l.b16 %v505
        %v600 = vunpack.c.h.b16 %v505
        %v601 = vunpack.c.l.b16 %v506
        %v602 = vunpack.c.h.b16 %v506
        %v603 = vunpack.c.l.b16 %v507
        %v604 = vunpack.c.h.b16 %v507
        %v605 = vunpack.c.l.b16 %v508
        %v606 = vunpack.c.h.b16 %v508
        %v607 = vunpack.c.l.b16 %v509
        %v608 = vunpack.c.h.b16 %v509
        %v609 = vunpack.c.l.b16 %v510
        %v610 = vunpack.c.h.b16 %v510
        %v611 = vunpack.c.l.b16 %v511
        %v612 = vunpack.c.h.b16 %v511
        %v613 = vunpack.c.l.b16 %v512
        %v614 = vunpack.c.h.b16 %v512
        %v615 = vunpack.c.l.b16 %v513
        %v616 = vunpack.c.h.b16 %v513
        %v617 = vunpack.c.l.b16 %v514
        %v618 = vunpack.c.h.b16 %v514
        %v619 = vunpack.c.l.b16 %v515
        %v620 = vunpack.c.h.b16 %v515
        %v621 = vunpack.c.l.b16 %v516
        %v622 = vunpack.c.h.b16 %v516
        %v623 = vunpack.c.l.b16 %v517
        %v624 = vunpack.c.h.b16 %v517
        %v625 = vunpack.c.l.b16 %v518
        %v626 = vunpack.c.h.b16 %v518
        %v627 = vpack.c.b16 %v565, %v563
        %v628 = vpack.c.b16 %v566, %v564
        %v629 = vpack.c.b16 %v569, %v567
        %v630 = vpack.c.b16 %v570, %v568
        %v631 = vpack.c.b16 %v573, %v571
        %v632 = vpack.c.b16 %v574, %v572
        %v633 = vpack.c.b16 %v577, %v575
        %v634 = vpack.c.b16 %v578, %v576
        %v635 = vpack.c.b16 %v581, %v579
        %v636 = vpack.c.b16 %v582, %v580
        %v637 = vpack.c.b16 %v585, %v583
        %v638 = vpack.c.b16 %v586, %v584
        %v639 = vpack.c.b16 %v589, %v587
        %v640 = vpack.c.b16 %v590, %v588
        %v641 = vpack.c.b16 %v593, %v591
        %v642 = vpack.c.b16 %v594, %v592
        %v643 = vpack.c.b16 %v597, %v595
        %v644 = vpack.c.b16 %v598, %v596
        %v645 = vpack.c.b16 %v601, %v599
        %v646 = vpack.c.b16 %v602, %v600
        %v647 = vpack.c.b16 %v605, %v603
        %v648 = vpack.c.b16 %v606, %v604
        %v649 = vpack.c.b16 %v609, %v607
        %v650 = vpack.c.b16 %v610, %v608
        %v651 = vpack.c.b16 %v613, %v611
        %v652 = vpack.c.b16 %v614, %v612
        %v653 = vpack.c.b16 %v617, %v615
        %v654 = vpack.c.b16 %v618, %v616
        %v655 = vpack.c.b16 %v621, %v619
        %v656 = vpack.c.b16 %v622, %v620
        %v657 = vpack.c.b16 %v625, %v623
        %v658 = vpack.c.b16 %v626, %v624
        %691 = vmatprep.subr.bf16.mxu0 %v642
        %692 = vmatpush1.bf16.msra.mxu0 %v641
        %693 = vmatprep.subr.bf16.mxu0 %v640
        %694 = vmatpush1.bf16.msra.mxu0 %v639
        %695 = vmatprep.subr.bf16.mxu0 %v638
        %696 = vmatpush1.bf16.msra.mxu0 %v637
        %697 = vmatprep.subr.bf16.mxu0 %v636
        %698 = vmatpush1.bf16.msra.mxu0 %v635
        %699 = vmatprep.subr.bf16.mxu0 %v634
        %700 = vmatpush1.bf16.msra.mxu0 %v633
        %701 = vmatprep.subr.bf16.mxu0 %v632
        %702 = vmatpush1.bf16.msra.mxu0 %v631
        %703 = vmatprep.subr.bf16.mxu0 %v630
        %704 = vmatpush1.bf16.msra.mxu0 %v629
        %705 = vmatprep.subr.bf16.mxu0 %v628
        %706 = vmatpush1.bf16.msra.mxu0 %v627
        %707 = vmatprep.subr.bf16.mxu0 %v658
        %708 = vmatpush2.bf16.msra.mxu0 %v657
        %709 = vmatprep.subr.bf16.mxu0 %v656
        %710 = vmatpush2.bf16.msra.mxu0 %v655
        %711 = vmatprep.subr.bf16.mxu0 %v654
        %712 = vmatpush2.bf16.msra.mxu0 %v653
        %713 = vmatprep.subr.bf16.mxu0 %v652
        %714 = vmatpush2.bf16.msra.mxu0 %v651
        %715 = vmatprep.subr.bf16.mxu0 %v650
        %716 = vmatpush2.bf16.msra.mxu0 %v649
        %717 = vmatprep.subr.bf16.mxu0 %v648
        %718 = vmatpush2.bf16.msra.mxu0 %v647
        %719 = vmatprep.subr.bf16.mxu0 %v646
        %720 = vmatpush2.bf16.msra.mxu0 %v645
        %721 = vmatprep.subr.bf16.mxu0 %v644
        %722 = vmatpush2.bf16.msra.mxu0 %v643
        %723 = vmatprep.mubr.bf16.mxu0 %v486
        %724 = vmatmul.mubr.bf16.gmra.mxu0 %v485
        %v725 = vpop.f32.mrf.mxu0
        %v726 = vadd.f32 %v524, %v725
        %v727 = vpop.f32.mrf.mxu0
        %v728 = vadd.f32 %v528, %v727
        %v729 = vpop.f32.mrf.mxu0
        %v730 = vpop.f32.mrf.mxu0
        %731 = vdwg.mxu0
        %v732 = vsub.f32 %v726, %v728
        %v733 = vmul.f32 %v732, %v732
        %v734 = vpack.c.bf16 %v733, %v733
        %v735 = vunpack.c.l.bf16 %v734
        %v736 = vsub.f32 %v733, %v735
        %v737 = vpack.c.bf16 %v736, %v736
        %v738 = vld [vmem:[%s7] sm:$0xf]
        %v739 = vld [vmem:[%s7 + $0x4] sm:$0xf]
        %v740 = vld [vmem:[%s7 + $0x8] sm:$0xf]
        %v741 = vld [vmem:[%s7 + $0xc] sm:$0xf]
        %v742 = vld [vmem:[%s7 + $0x10] sm:$0xf]
        %v743 = vld [vmem:[%s7 + $0x14] sm:$0xf]
        %v744 = vld [vmem:[%s7 + $0x18] sm:$0xf]
        %v745 = vld [vmem:[%s7 + $0x1c] sm:$0xf]
        %v746 = vld [vmem:[%s7 + $0x20] sm:$0xf]
        %v747 = vld [vmem:[%s7 + $0x24] sm:$0xf]
        %v748 = vld [vmem:[%s7 + $0x28] sm:$0xf]
        %v749 = vld [vmem:[%s7 + $0x2c] sm:$0xf]
        %v750 = vld [vmem:[%s7 + $0x30] sm:$0xf]
        %v751 = vld [vmem:[%s7 + $0x34] sm:$0xf]
        %v752 = vld [vmem:[%s7 + $0x38] sm:$0xf]
        %v753 = vld [vmem:[%s7 + $0x3c] sm:$0xf]
        %v770 = vunpack.c.l.b16 %v738
        %v771 = vunpack.c.l.b16 %v739
        %v772 = vunpack.c.l.b16 %v740
        %v773 = vunpack.c.l.b16 %v741
        %v774 = vunpack.c.l.b16 %v742
        %v775 = vunpack.c.l.b16 %v743
        %v776 = vunpack.c.l.b16 %v744
        %v777 = vunpack.c.l.b16 %v745
        %v778 = vunpack.c.l.b16 %v746
        %v779 = vunpack.c.l.b16 %v747
        %v780 = vunpack.c.l.b16 %v748
        %v781 = vunpack.c.l.b16 %v749
        %v782 = vunpack.c.l.b16 %v750
        %v783 = vunpack.c.l.b16 %v751
        %v784 = vunpack.c.l.b16 %v752
        %v785 = vunpack.c.l.b16 %v753
        %v786 = vpack.c.b16 %v771, %v770
        %v787 = vpack.c.b16 %v773, %v772
        %v788 = vpack.c.b16 %v775, %v774
        %v789 = vpack.c.b16 %v777, %v776
        %v790 = vpack.c.b16 %v779, %v778
        %v791 = vpack.c.b16 %v781, %v780
        %v792 = vpack.c.b16 %v783, %v782
        %v793 = vpack.c.b16 %v785, %v784
        %802 = vmatprep.subr.bf16.mxu0 0
        %803 = vmatpush1.bf16.msra.mxu0 %v793
        %804 = vmatprep.subr.bf16.mxu0 0
        %805 = vmatpush1.bf16.msra.mxu0 %v792
        %806 = vmatprep.subr.bf16.mxu0 0
        %807 = vmatpush1.bf16.msra.mxu0 %v791
        %808 = vmatprep.subr.bf16.mxu0 0
        %809 = vmatpush1.bf16.msra.mxu0 %v790
        %810 = vmatprep.subr.bf16.mxu0 0
        %811 = vmatpush1.bf16.msra.mxu0 %v789
        %812 = vmatprep.subr.bf16.mxu0 0
        %813 = vmatpush1.bf16.msra.mxu0 %v788
        %814 = vmatprep.subr.bf16.mxu0 0
        %815 = vmatpush1.bf16.msra.mxu0 %v787
        %816 = vmatprep.subr.bf16.mxu0 0
        %817 = vmatpush1.bf16.msra.mxu0 %v786
        %818 = vmatprep.subr.bf16.mxu0 0
        %819 = vmatpush2.bf16.msra.mxu0 0
        %820 = vmatprep.subr.bf16.mxu0 0
        %821 = vmatpush2.bf16.msra.mxu0 0
        %822 = vmatprep.subr.bf16.mxu0 0
        %823 = vmatpush2.bf16.msra.mxu0 0
        %824 = vmatprep.subr.bf16.mxu0 0
        %825 = vmatpush2.bf16.msra.mxu0 0
        %826 = vmatprep.subr.bf16.mxu0 0
        %827 = vmatpush2.bf16.msra.mxu0 0
        %828 = vmatprep.subr.bf16.mxu0 0
        %829 = vmatpush2.bf16.msra.mxu0 0
        %830 = vmatprep.subr.bf16.mxu0 0
        %831 = vmatpush2.bf16.msra.mxu0 0
        %832 = vmatprep.subr.bf16.mxu0 0
        %833 = vmatpush2.bf16.msra.mxu0 0
        %834 = vmatprep.mubr.bf16.mxu0 0
        %835 = vmatmul.mubr.bf16.gmra.mxu0 %v737
        %v836 = vpop.f32.mrf.mxu0
        %v837 = vadd.f32 0.0, %v836
        %v838 = vpop.f32.mrf.mxu0
        %v839 = vpop.f32.mrf.mxu0
        %v840 = vpop.f32.mrf.mxu0
        %841 = vdwg.mxu0
        %842 = vmatprep.subr.bf16.mxu0 0
        %843 = vmatpush1.bf16.msra.mxu0 %v793
        %844 = vmatprep.subr.bf16.mxu0 0
        %845 = vmatpush1.bf16.msra.mxu0 %v792
        %846 = vmatprep.subr.bf16.mxu0 0
        %847 = vmatpush1.bf16.msra.mxu0 %v791
        %848 = vmatprep.subr.bf16.mxu0 0
        %849 = vmatpush1.bf16.msra.mxu0 %v790
        %850 = vmatprep.subr.bf16.mxu0 0
        %851 = vmatpush1.bf16.msra.mxu0 %v789
        %852 = vmatprep.subr.bf16.mxu0 0
        %853 = vmatpush1.bf16.msra.mxu0 %v788
        %854 = vmatprep.subr.bf16.mxu0 0
        %855 = vmatpush1.bf16.msra.mxu0 %v787
        %856 = vmatprep.subr.bf16.mxu0 0
        %857 = vmatpush1.bf16.msra.mxu0 %v786
        %858 = vmatprep.subr.bf16.mxu0 0
        %859 = vmatpush2.bf16.msra.mxu0 0
        %860 = vmatprep.subr.bf16.mxu0 0
        %861 = vmatpush2.bf16.msra.mxu0 0
        %862 = vmatprep.subr.bf16.mxu0 0
        %863 = vmatpush2.bf16.msra.mxu0 0
        %864 = vmatprep.subr.bf16.mxu0 0
        %865 = vmatpush2.bf16.msra.mxu0 0
        %866 = vmatprep.subr.bf16.mxu0 0
        %867 = vmatpush2.bf16.msra.mxu0 0
        %868 = vmatprep.subr.bf16.mxu0 0
        %869 = vmatpush2.bf16.msra.mxu0 0
        %870 = vmatprep.subr.bf16.mxu0 0
        %871 = vmatpush2.bf16.msra.mxu0 0
        %872 = vmatprep.subr.bf16.mxu0 0
        %873 = vmatpush2.bf16.msra.mxu0 0
        %874 = vmatprep.mubr.bf16.mxu0 0
        %875 = vmatmul.mubr.bf16.gmra.mxu0 %v734
        %v876 = vpop.f32.mrf.mxu0
        %v877 = vadd.f32 %v837, %v876
        %v878 = vpop.f32.mrf.mxu0
        %v879 = vpop.f32.mrf.mxu0
        %v880 = vpop.f32.mrf.mxu0
        %881 = vdwg.mxu0
        %v882 = vadd.f32 %v877, 1e-05
        %v883 = vrsqrt.pop %v882
        %v884 = vmul.f32 %v732, %v883
        %v885 = vld [vmem:[%s5] sm:$0x1]
        %v887 = vlaneseq
        %v888 = vshrl.u32 %v887, 7
        %v889 = vsub.s32 0, %v888
        %v890 = vrot.slane %v885, %v889
        %v892 = vmul.f32 %v884, %v890
        %v893 = vld [vmem:[%s6] sm:$0x1]
        %v895 = vlaneseq
        %v896 = vshrl.u32 %v895, 7
        %v897 = vsub.s32 0, %v896
        %v898 = vrot.slane %v893, %v897
        %v900 = vadd.f32 %v892, %v898
        %v901 = vpack.c.bf16 %v900, %v900
        %902 = vst [vmem:[%s330] sm:$0xf] %v901
        %p903 = scmp.lt.s32.totalorder %s21, 1
        %s904 = scalar_select %p903, %s21, 1
        %s905 = smul.addr %s904, 4
        %s906 = scalar_lea.vmem %s8, %s905
        // Predicated region
        $region61: #{apply.1} parent=51 // pred_check
          %p907 = pneg %p212
        $region62: #{apply.1} parent=51 // pred_check_branch
          %909 = sbr.rel (%p907) target = $region64
        $region63: #{apply.1} parent=51 // pred_region
          _
        $region64: #{apply.1} parent=51 // pred_fallthru
          _
      $region52: #{apply.1} parent=5 // pred_fallthru
        _
      %p910 = scmp.le.s32.totalorder 2, %s16
      // Predicated region
      $region65: #{apply.1} parent=5 // pred_check
        %p911 = pneg %p910
      $region66: #{apply.1} parent=5 // pred_check_branch
        %913 = sbr.rel (%p911) target = $region68
      $region67: #{apply.1} parent=5 // pred_region
        %s914 = ssub.s32 %s16, 2
        // Predicated region
        $region69: #{apply.1} parent=67 // pred_check
          %p915 = pneg %p218
        $region70: #{apply.1} parent=67 // pred_check_branch
          %917 = sbr.rel (%p915) target = $region72
        $region71: #{apply.1} parent=67 // pred_region
          %p918 = scmp.lt.s32.totalorder %s22, 1
          %s919 = scalar_select %p918, %s22, 1
          %s920 = smul.addr %s919, 4
          %s921 = scalar_lea.vmem %s8, %s920
        $region72: #{apply.1} parent=67 // pred_fallthru
          _
      $region68: #{apply.1} parent=5 // pred_fallthru
        _
    $region6: #{apply.1} parent=1 // loop_footer
      %s20 = sadd.s32 1, %s16
    $region7: #{apply.1} parent=1 // loop_footer_branch
      %15 = sbr.rel target = $region3
    $region8: #{apply.1} parent=1 // loop_exit
      _
    %922 = vsyncpa [#allocation3], 1
    %s923 = scalar_lea.sflag [#allocation3], 1
    %924 = vsyncpa %s923, 1
    %925 = vsyncpa [#allocation5], 1

</llo_original>
